<compile_context>
chip_gen: v6e
topology: v6e:2x2x1
jax: 0.10.0
libtpu: 0.0.40
codegen_flags: <defaults>
</compile_context>

<pallas_src>
import functools

import jax
import jax.numpy as jnp
from jax import lax
from jax.experimental import pallas as pl
from jax.experimental.pallas import tpu as pltpu


def _round_up(x, m):
    return ((x + m - 1) // m) * m


def _pick_tile(n128):
    # Largest tile in {1024, 512, 256, 128} that still yields >= 2 row tiles.
    for t in (1024, 512, 256, 128):
        if n128 >= 2 * t:
            return t
    return 128


def _sigmoid(h):
    return 1.0 / (1.0 + jnp.exp(-h))


def _stamp(y, owner_id, n_stamp, stamp_start):
    # Fold the owner-id stamp into the value -> one lane-dense store.
    if n_stamp <= 0:
        return y
    col = lax.broadcasted_iota(jnp.int32, y.shape, 1)
    mask = (col >= stamp_start) & (col < stamp_start + n_stamp)
    return jnp.where(mask, jnp.float32(owner_id), y)


# ------------------- fused small-N kernel: both layers in one call ------------------ #
def _fused_kernel(a_ref, x_ref, w1_ref, b1_ref, w2_ref, b2_ref, o_ref, *,
                  owner_id, n_stamp, stamp_start):
    a = a_ref[...]                                                    # bf16
    xw1 = jnp.dot(x_ref[...], w1_ref[...],
                  preferred_element_type=jnp.float32).astype(jnp.bfloat16)
    h = jnp.maximum(
        jnp.dot(a, xw1, preferred_element_type=jnp.float32) + b1_ref[...], 0.0)
    xw2 = jnp.dot(h.astype(jnp.bfloat16), w2_ref[...],
                  preferred_element_type=jnp.float32).astype(jnp.bfloat16)
    y = _sigmoid(jnp.dot(a, xw2, preferred_element_type=jnp.float32) + b2_ref[...])
    y = _stamp(y, owner_id, n_stamp, stamp_start)
    o_ref[...] = y.astype(o_ref.dtype)


def fused_forward(a_pad, x_pad, w1, b1, w2, b2, *, owner_id, n_stamp, stamp_start):
    n_pad = a_pad.shape[0]
    c_in_pad = x_pad.shape[1]
    hid_pad = w1.shape[1]
    kernel = functools.partial(
        _fused_kernel, owner_id=float(owner_id),
        n_stamp=int(n_stamp), stamp_start=int(stamp_start))
    return pl.pallas_call(
        kernel,
        out_shape=jax.ShapeDtypeStruct((n_pad, c_in_pad), jnp.float32),
        grid=(1,),
        in_specs=[
            pl.BlockSpec((n_pad, n_pad), lambda i: (0, 0)),
            pl.BlockSpec((n_pad, c_in_pad), lambda i: (0, 0)),
            pl.BlockSpec((c_in_pad, hid_pad), lambda i: (0, 0)),
            pl.BlockSpec((1, hid_pad), lambda i: (0, 0)),
            pl.BlockSpec((hid_pad, c_in_pad), lambda i: (0, 0)),
            pl.BlockSpec((1, c_in_pad), lambda i: (0, 0)),
        ],
        out_specs=pl.BlockSpec((n_pad, c_in_pad), lambda i: (0, 0)),
    )(a_pad, x_pad, w1, b1, w2, b2)


# -------------------- kernel 1 (split path): XW = X @ W, row tiled ------------------ #
def _xw_kernel(x_ref, w_ref, o_ref):
    o_ref[...] = jnp.dot(
        x_ref[...], w_ref[...], preferred_element_type=jnp.float32
    ).astype(o_ref.dtype)


def compute_xw(x_bf16, w_bf16, *, tm):
    """X [n_pad, c_in_pad] @ W [c_in_pad, c_out_pad] -> bf16 [n_pad, c_out_pad]."""
    n_pad, c_in = x_bf16.shape
    c_out = w_bf16.shape[1]
    return pl.pallas_call(
        _xw_kernel,
        out_shape=jax.ShapeDtypeStruct((n_pad, c_out), jnp.bfloat16),
        grid_spec=pltpu.PrefetchScalarGridSpec(
            num_scalar_prefetch=0,
            grid=(n_pad // tm,),
            in_specs=[
                pl.BlockSpec((tm, c_in), lambda i: (i, 0)),
                pl.BlockSpec((c_in, c_out), lambda i: (0, 0)),
            ],
            out_specs=pl.BlockSpec((tm, c_out), lambda i: (i, 0)),
        ),
        compiler_params=pltpu.CompilerParams(dimension_semantics=("parallel",)),
    )(x_bf16, w_bf16)


# -------- kernel 2 (split path): act(A_hat @ XW + b), tiled reduction + stamp ------- #
def _aggregate_kernel(a_ref, xw_ref, b_ref, o_ref, acc_ref, *, tk, activation,
                      owner_id, n_stamp, stamp_start, xw_resident):
    k = pl.program_id(1)

    @pl.when(k == 0)
    def _():
        # Initialize the accumulator with the broadcast bias (drops the add
        # from the serialized finalize epilogue).
        acc_ref[...] = jnp.broadcast_to(b_ref[...], acc_ref.shape)

    if xw_resident:
        off = pl.multiple_of(k * tk, 128)
        xw = xw_ref[pl.ds(off, tk), :]          # slice the VMEM-resident XW
    else:
        xw = xw_ref[...]                        # streamed (tk, c_out) block
    # bf16 x bf16 -> f32 accumulate on the MXU
    acc_ref[...] += jnp.dot(a_ref[...], xw, preferred_element_type=jnp.float32)

    @pl.when(k == pl.num_programs(1) - 1)
    def _():
        h = acc_ref[...]
        if activation == "relu":
            y = jnp.maximum(h, 0.0)
        elif activation == "sigmoid":
            y = _sigmoid(h)
        else:
            y = h
        y = _stamp(y, owner_id, n_stamp, stamp_start)
        o_ref[...] = y.astype(o_ref.dtype)      # single lane-dense store


def gcn_aggregate(a_bf16, xw_bf16, b_f32, *, tm, tk, activation, out_dtype,
                  owner_id=0.0, n_stamp=0, stamp_start=0):
    n_pad = a_bf16.shape[0]
    c_out = xw_bf16.shape[1]
    out_bytes = jnp.dtype(out_dtype).itemsize

    def vmem_est(resident):
        a_buf = 2 * tm * tk * 2                                   # A double-buffered
        xw_buf = 2 * (n_pad if resident else tk) * c_out * 2      # XW (conservative x2)
        b_buf = 2 * c_out * 4
        o_buf = 2 * tm * c_out * out_bytes
        acc = tm * c_out * 4
        return a_buf + xw_buf + b_buf + o_buf + acc

    xw_resident = vmem_est(True) <= (44 << 20)     # conservative vs v7x 64 MiB VMEM
    est = vmem_est(xw_resident)

    if xw_resident:
        xw_spec = pl.BlockSpec((n_pad, c_out), lambda i, k: (0, 0))
    else:
        xw_spec = pl.BlockSpec((tk, c_out), lambda i, k: (k, 0))

    cp_kwargs = {"dimension_semantics": ("parallel", "arbitrary")}
    if est > (12 << 20):   # only override the scoped VMEM limit when needed
        cp_kwargs["vmem_limit_bytes"] = int(min(est + (est >> 2) + (4 << 20), 48 << 20))

    kernel = functools.partial(
        _aggregate_kernel, tk=tk, activation=activation,
        owner_id=float(owner_id), n_stamp=int(n_stamp),
        stamp_start=int(stamp_start), xw_resident=xw_resident)

    return pl.pallas_call(
        kernel,
        out_shape=jax.ShapeDtypeStruct((n_pad, c_out), out_dtype),
        grid_spec=pltpu.PrefetchScalarGridSpec(
            num_scalar_prefetch=0,
            grid=(n_pad // tm, n_pad // tk),            # reduction (k) axis last
            in_specs=[
                pl.BlockSpec((tm, tk), lambda i, k: (i, k)),   # A_hat tile (streamed)
                xw_spec,                                        # XW (resident or streamed)
                pl.BlockSpec((1, c_out), lambda i, k: (0, 0)),  # bias row
            ],
            out_specs=pl.BlockSpec((tm, c_out), lambda i, k: (i, 0)),
            scratch_shapes=[pltpu.VMEM((tm, c_out), jnp.float32)],
        ),
        compiler_params=pltpu.CompilerParams(**cp_kwargs),
    )(a_bf16, xw_bf16, b_f32)


# ----------------------------------- Glue (JAX) ------------------------------------- #
def build_norm_adj_padded(edge_index, num_nodes, n_pad):
    """Dense D^{-1/2} (A + I) D^{-1/2} (PyG gcn_norm, source->target), built
    directly at the padded size and cast to bf16 once (padded rows/cols = 0)."""
    src, dst = edge_index[0], edge_index[1]
    a = jnp.zeros((n_pad, n_pad), jnp.float32)
    a = a.at[dst, src].add(1.0)                       # message j -> i at A[i, j]
    idx = jnp.arange(num_nodes)
    diag = a[idx, idx]
    a = a.at[idx, idx].set(jnp.where(diag > 0, diag, 1.0))   # remaining self-loops
    deg = a.sum(axis=1)
    dinv = jnp.where(deg > 0, lax.rsqrt(deg), 0.0)            # padded rows -> 0
    return (dinv[:, None] * a * dinv[None, :]).astype(jnp.bfloat16)


def glorot(key, shape):
    limit = jnp.sqrt(6.0 / (shape[0] + shape[1]))
    return jax.random.uniform(key, shape, jnp.float32, -limit, limit)


def init_trigger_generator(key, in_channels, hidden_channels):
    k1, k2 = jax.random.split(key)
    return {
        "w1": glorot(k1, (in_channels, hidden_channels)),
        "b1": jnp.zeros((hidden_channels,), jnp.float32),
        "w2": glorot(k2, (hidden_channels, in_channels)),
        "b2": jnp.zeros((in_channels,), jnp.float32),
    }


def trigger_generator_forward(params, x, edge_index, owner_id, *, force_split=False):
    n, c_in = x.shape
    hidden = params["w1"].shape[1]
    n_stamp = min(5, c_in)            # PyTorch out[:, -5:] = owner_id (guarded)
    stamp_start = c_in - n_stamp

    n128 = _round_up(max(n, 8), 128)
    c_in_pad = _round_up(c_in, 128)
    hid_pad = _round_up(hidden, 128)

    # Fused-path feasibility: everything (A, X, W, out, f32 intermediates) in VMEM.
    fused_bytes = (n128 * n128 * 2
                   + n128 * (c_in_pad + hid_pad) * 2
                   + 2 * c_in_pad * hid_pad * 2
                   + n128 * c_in_pad * 4
                   + 3 * n128 * max(c_in_pad, hid_pad) * 4)
    use_fused = (not force_split) and n128 <= 2048 and fused_bytes <= (20 << 20)

    if use_fused:
        n_pad = n128
        tm = tk = None
    else:
        tm = _pick_tile(n128)          # 512/1024 when large; >= 2 row tiles for v7x
        tk = tm
        n_pad = _round_up(n128, tm)

    # normalized adjacency built directly at padded size, bf16
    a_pad = build_norm_adj_padded(edge_index, n, n_pad)

    # zero-pad features / params to lane-dense widths (bf16 streaming, f32 bias)
    x_pad = jnp.zeros((n_pad, c_in_pad), jnp.bfloat16).at[:n, :c_in].set(
        x.astype(jnp.bfloat16))
    w1 = jnp.zeros((c_in_pad, hid_pad), jnp.bfloat16).at[:c_in, :hidden].set(
        params["w1"].astype(jnp.bfloat16))
    b1 = jnp.zeros((1, hid_pad), jnp.float32).at[0, :hidden].set(params["b1"])
    w2 = jnp.zeros((hid_pad, c_in_pad), jnp.bfloat16).at[:hidden, :c_in].set(
        params["w2"].astype(jnp.bfloat16))
    b2 = jnp.zeros((1, c_in_pad), jnp.float32).at[0, :c_in].set(params["b2"])

    if use_fused:
        out_pad = fused_forward(a_pad, x_pad, w1, b1, w2, b2, owner_id=owner_id,
                                n_stamp=n_stamp, stamp_start=stamp_start)
    else:
        # layer 1: relu(A_hat @ (X @ W1) + b1), emitted directly as bf16
        xw1 = compute_xw(x_pad, w1, tm=tm)
        h = gcn_aggregate(a_pad, xw1, b1, tm=tm, tk=tk, activation="relu",
                          out_dtype=jnp.bfloat16)
        # layer 2: sigmoid(A_hat @ (H @ W2) + b2); stamp last columns
        xw2 = compute_xw(h, w2, tm=tm)
        out_pad = gcn_aggregate(a_pad, xw2, b2, tm=tm, tk=tk, activation="sigmoid",
                                out_dtype=jnp.float32, owner_id=owner_id,
                                n_stamp=n_stamp, stamp_start=stamp_start)
    return out_pad[:n, :c_in]


# ----------------------- pure-JAX reference (bf16-matched) -------------------------- #
def reference_forward(params, x, edge_index, owner_id):
    n, c_in = x.shape

    def bf(v):
        return v.astype(jnp.bfloat16).astype(jnp.float32)

    a = build_norm_adj_padded(edge_index, n, n).astype(jnp.float32)
    xw1 = bf(bf(x) @ bf(params["w1"]))
    h = jnp.maximum(a @ xw1 + params["b1"][None, :], 0.0)
    xw2 = bf(bf(h) @ bf(params["w2"]))
    out = _sigmoid(a @ xw2 + params["b2"][None, :])
    n_stamp = min(5, c_in)
    return out.at[:, c_in - n_stamp:].set(float(owner_id))


# ----------------------------------- Main ------------------------------------------- #
if __name__ == "__main__":
    IN_CHANNELS = 16   # must be >= 5 (last 5 feature columns get owner_id)
    HIDDEN = 32
    OWNER_ID = 1.0

    key = jax.random.PRNGKey(0)
    kx, kp = jax.random.split(key)
    params = init_trigger_generator(kp, IN_CHANNELS, HIDDEN)

    def make_graph(n, kxx):
        xg = jax.random.normal(kxx, (n, IN_CHANNELS), jnp.float32)
        src = jnp.arange(n, dtype=jnp.int32)
        dst = (src + 1) % n
        ei = jnp.stack([jnp.concatenate([src, dst]),
                        jnp.concatenate([dst, src])], axis=0)
        return xg, ei

    # --- small graph: fused single-call path ---
    N = 8
    x, edge_index = make_graph(N, kx)
    out = jax.block_until_ready(
        trigger_generator_forward(params, x, edge_index, OWNER_ID))
    assert out.shape == (N, IN_CHANNELS)
    assert bool(jnp.all(out[:, -5:] == OWNER_ID))
    assert bool(jnp.all((out[:, :-5] >= 0.0) & (out[:, :-5] <= 1.0)))
    ref = reference_forward(params, x, edge_index, OWNER_ID)
    assert bool(jnp.allclose(out, ref, atol=2e-3)), "fused path mismatch"

    # --- larger graph: exercise the tiled split path (multi-k reduction,
    #     resident XW, bias-init accumulator, bf16 layer-1 output) ---
    N2 = 200
    x2, edge_index2 = make_graph(N2, kx)
    out2 = jax.block_until_ready(
        trigger_generator_forward(params, x2, edge_index2, OWNER_ID,
                                  force_split=True))
    assert out2.shape == (N2, IN_CHANNELS)
    assert bool(jnp.all(out2[:, -5:] == OWNER_ID))
    ref2 = reference_forward(params, x2, edge_index2, OWNER_ID)
    assert bool(jnp.allclose(out2, ref2, atol=2e-3)), "split path mismatch"

    print("KERNEL_OK")
</pallas_src>

<mosaic_0001>
module attributes {stable_mosaic.version = 11 : i64} {
  func.func @_fused_kernel(%arg0: i32, %arg1: memref<128x128xbf16, #tpu.memory_space<vmem>>, %arg2: memref<128x128xbf16, #tpu.memory_space<vmem>>, %arg3: memref<128x128xbf16, #tpu.memory_space<vmem>>, %arg4: memref<1x128xf32, #tpu.memory_space<vmem>>, %arg5: memref<128x128xbf16, #tpu.memory_space<vmem>>, %arg6: memref<1x128xf32, #tpu.memory_space<vmem>>, %arg7: memref<128x128xf32, #tpu.memory_space<vmem>>) attributes {dimension_semantics = [#tpu.dimension_semantics<arbitrary>], iteration_bounds = array<i64: 1>, scalar_prefetch = 0 : i64, scratch_operands = 0 : i64, tpu.core_type = #tpu.core_type<tc>, window_params = [{pipeline_mode = #tpu.pipeline_mode<synchronous>, transform_indices = @transform_0, window_bounds = array<i64: 128, 128>}, {pipeline_mode = #tpu.pipeline_mode<synchronous>, transform_indices = @transform_1, window_bounds = array<i64: 128, 128>}, {pipeline_mode = #tpu.pipeline_mode<synchronous>, transform_indices = @transform_2, window_bounds = array<i64: 128, 128>}, {pipeline_mode = #tpu.pipeline_mode<synchronous>, transform_indices = @transform_3, window_bounds = array<i64: 1, 128>}, {pipeline_mode = #tpu.pipeline_mode<synchronous>, transform_indices = @transform_4, window_bounds = array<i64: 128, 128>}, {pipeline_mode = #tpu.pipeline_mode<synchronous>, transform_indices = @transform_5, window_bounds = array<i64: 1, 128>}, {pipeline_mode = #tpu.pipeline_mode<synchronous>, transform_indices = @transform_6, window_bounds = array<i64: 128, 128>}]} {
    %c0 = arith.constant 0 : index
    %c0_0 = arith.constant 0 : index
    %0 = vector.load %arg1[%c0, %c0_0] : memref<128x128xbf16, #tpu.memory_space<vmem>>, vector<128x128xbf16>
    %c0_1 = arith.constant 0 : index
    %c0_2 = arith.constant 0 : index
    %1 = vector.load %arg2[%c0_1, %c0_2] : memref<128x128xbf16, #tpu.memory_space<vmem>>, vector<128x128xbf16>
    %c0_3 = arith.constant 0 : index
    %c0_4 = arith.constant 0 : index
    %2 = vector.load %arg3[%c0_3, %c0_4] : memref<128x128xbf16, #tpu.memory_space<vmem>>, vector<128x128xbf16>
    %cst = arith.constant dense<0.000000e+00> : vector<128x128xf32>
    %3 = tpu.matmul %1, %2, %cst {dimension_numbers = #tpu.dot_dimension_numbers<[1], [0], [0], [1], [0, 0, 1, 1], [], []>} : vector<128x128xbf16>, vector<128x128xbf16>, vector<128x128xf32> -> vector<128x128xf32>
    %4 = arith.truncf %3 : vector<128x128xf32> to vector<128x128xbf16>
    %cst_5 = arith.constant dense<0.000000e+00> : vector<128x128xf32>
    %5 = tpu.matmul %0, %4, %cst_5 {dimension_numbers = #tpu.dot_dimension_numbers<[1], [0], [0], [1], [0, 0, 1, 1], [], []>} : vector<128x128xbf16>, vector<128x128xbf16>, vector<128x128xf32> -> vector<128x128xf32>
    %c0_6 = arith.constant 0 : index
    %c0_7 = arith.constant 0 : index
    %6 = vector.load %arg4[%c0_6, %c0_7] : memref<1x128xf32, #tpu.memory_space<vmem>>, vector<1x128xf32>
    %7 = vector.broadcast %6 : vector<1x128xf32> to vector<128x128xf32>
    %8 = arith.addf %5, %7 : vector<128x128xf32>
    %cst_8 = arith.constant 0.000000e+00 : f32
    %9 = vector.broadcast %cst_8 : f32 to vector<128x128xf32>
    %10 = arith.maximumf %8, %9 : vector<128x128xf32>
    %11 = arith.truncf %10 : vector<128x128xf32> to vector<128x128xbf16>
    %c0_9 = arith.constant 0 : index
    %c0_10 = arith.constant 0 : index
    %12 = vector.load %arg5[%c0_9, %c0_10] : memref<128x128xbf16, #tpu.memory_space<vmem>>, vector<128x128xbf16>
    %cst_11 = arith.constant dense<0.000000e+00> : vector<128x128xf32>
    %13 = tpu.matmul %11, %12, %cst_11 {dimension_numbers = #tpu.dot_dimension_numbers<[1], [0], [0], [1], [0, 0, 1, 1], [], []>} : vector<128x128xbf16>, vector<128x128xbf16>, vector<128x128xf32> -> vector<128x128xf32>
    %14 = arith.truncf %13 : vector<128x128xf32> to vector<128x128xbf16>
    %cst_12 = arith.constant dense<0.000000e+00> : vector<128x128xf32>
    %15 = tpu.matmul %0, %14, %cst_12 {dimension_numbers = #tpu.dot_dimension_numbers<[1], [0], [0], [1], [0, 0, 1, 1], [], []>} : vector<128x128xbf16>, vector<128x128xbf16>, vector<128x128xf32> -> vector<128x128xf32>
    %c0_13 = arith.constant 0 : index
    %c0_14 = arith.constant 0 : index
    %16 = vector.load %arg6[%c0_13, %c0_14] : memref<1x128xf32, #tpu.memory_space<vmem>>, vector<1x128xf32>
    %17 = vector.broadcast %16 : vector<1x128xf32> to vector<128x128xf32>
    %18 = arith.addf %15, %17 : vector<128x128xf32>
    %cst_15 = arith.constant 0.000000e+00 : f32
    %19 = vector.broadcast %cst_15 : f32 to vector<128x128xf32>
    %20 = arith.subf %19, %18 : vector<128x128xf32>
    %21 = math.exp %20 : vector<128x128xf32>
    %cst_16 = arith.constant 1.000000e+00 : f32
    %22 = vector.broadcast %cst_16 : f32 to vector<128x128xf32>
    %23 = arith.addf %22, %21 : vector<128x128xf32>
    %cst_17 = arith.constant 1.000000e+00 : f32
    %24 = vector.broadcast %cst_17 : f32 to vector<128x128xf32>
    %25 = arith.divf %24, %23 : vector<128x128xf32>
    %26 = tpu.iota {dimensions = array<i32: 1>} : vector<128x128xi32>
    %c11_i32 = arith.constant 11 : i32
    %27 = vector.broadcast %c11_i32 : i32 to vector<128x128xi32>
    %28 = arith.cmpi sge, %26, %27 : vector<128x128xi32>
    %c16_i32 = arith.constant 16 : i32
    %29 = vector.broadcast %c16_i32 : i32 to vector<128x128xi32>
    %30 = arith.cmpi slt, %26, %29 : vector<128x128xi32>
    %31 = arith.andi %28, %30 : vector<128x128xi1>
    %cst_18 = arith.constant 1.000000e+00 : f32
    %32 = vector.broadcast %cst_18 : f32 to vector<128x128xf32>
    %33 = arith.select %31, %32, %25 : vector<128x128xi1>, vector<128x128xf32>
    %c0_19 = arith.constant 0 : index
    %c0_20 = arith.constant 0 : index
    %34 = vector.load %arg7[%c0_19, %c0_20] : memref<128x128xf32, #tpu.memory_space<vmem>>, vector<128x128xf32>
    tpu.vector_store %arg7[%c0_19, %c0_20], %33 {strides = array<i32>} : memref<128x128xf32, #tpu.memory_space<vmem>>, vector<128x128xf32>,
    return
  }
  func.func @transform_0(%arg0: i32) -> (i32, i32) {
    %c0_i32 = arith.constant 0 : i32
    %c0_i32_0 = arith.constant 0 : i32
    %c0_i32_1 = arith.constant 0 : i32
    return %c0_i32, %c0_i32_0 : i32, i32
  }
  func.func @transform_1(%arg0: i32) -> (i32, i32) {
    %c0_i32 = arith.constant 0 : i32
    %c0_i32_0 = arith.constant 0 : i32
    %c0_i32_1 = arith.constant 0 : i32
    return %c0_i32, %c0_i32_0 : i32, i32
  }
  func.func @transform_2(%arg0: i32) -> (i32, i32) {
    %c0_i32 = arith.constant 0 : i32
    %c0_i32_0 = arith.constant 0 : i32
    %c0_i32_1 = arith.constant 0 : i32
    return %c0_i32, %c0_i32_0 : i32, i32
  }
  func.func @transform_3(%arg0: i32) -> (i32, i32) {
    %c0_i32 = arith.constant 0 : i32
    %c0_i32_0 = arith.constant 0 : i32
    %c0_i32_1 = arith.constant 0 : i32
    return %c0_i32, %c0_i32_0 : i32, i32
  }
  func.func @transform_4(%arg0: i32) -> (i32, i32) {
    %c0_i32 = arith.constant 0 : i32
    %c0_i32_0 = arith.constant 0 : i32
    %c0_i32_1 = arith.constant 0 : i32
    return %c0_i32, %c0_i32_0 : i32, i32
  }
  func.func @transform_5(%arg0: i32) -> (i32, i32) {
    %c0_i32 = arith.constant 0 : i32
    %c0_i32_0 = arith.constant 0 : i32
    %c0_i32_1 = arith.constant 0 : i32
    return %c0_i32, %c0_i32_0 : i32, i32
  }
  func.func @transform_6(%arg0: i32) -> (i32, i32) {
    %c0_i32 = arith.constant 0 : i32
    %c0_i32_0 = arith.constant 0 : i32
    %c0_i32_1 = arith.constant 0 : i32
    return %c0_i32, %c0_i32_0 : i32, i32
  }
}

</mosaic_0001>

<llo_original>
// kernel: tpu_custom_call.1
$region0: #{tpu_custom_call.1}
  #allocation0 [shape = 'u32[]', space=smem, size = 0x4, offset = 0x4, fixed_abs, tag = 'smem constant byte address 0x4 - core index']
  #allocation1 [shape = 'u32[144,128]{1,0:T(1,128)}', space=vmem, size = 0x12000, scoped, tag = 'internal scratch']
  %s0 = inlined_call_operand.hbm [shape: bf16[128,128], index: 0, kind: input, shape index: {}]
  %s1 = inlined_call_operand.hbm [shape: bf16[128,128], index: 1, kind: input, shape index: {}]
  %s2 = inlined_call_operand.hbm [shape: bf16[128,128], index: 2, kind: input, shape index: {}]
  %s3 = inlined_call_operand.vmem [shape: f32[1,128], index: 3, kind: input, shape index: {}]
  %s4 = inlined_call_operand.hbm [shape: bf16[128,128], index: 4, kind: input, shape index: {}]
  %s5 = inlined_call_operand.vmem [shape: f32[1,128], index: 5, kind: input, shape index: {}]
  %s6 = inlined_call_operand.hbm [shape: f32[128,128], index: 6, kind: output, shape index: {}]
  %s7 = sld [smem:[#allocation0]]
  $region50: #{tpu_custom_call.1} parent=0
    _
  %s9 = ssub.s32 1, %s7
  %s10 = scalar_select 0, %s9, %s7
  $region1: #{tpu_custom_call.1} parent=0
    #allocation2 [shape = 'u8[32768]{0}', space=vmem, size = 0x8000, scoped, tag = 'input window, operand 0, single buffered']
    #allocation3 [shape = 's32[1]{0}', space=sflag, size = 0x4, scoped, tag = 'scoped memory for tpu_custom_call.1']
    #allocation4 [shape = 's32[1]{0}', space=sflag, size = 0x4, scoped, tag = 'scoped memory for tpu_custom_call.1']
    #allocation5 [shape = 'u8[32768]{0}', space=vmem, size = 0x8000, scoped, tag = 'input window, operand 1, single buffered']
    #allocation6 [shape = 's32[1]{0}', space=sflag, size = 0x4, scoped, tag = 'scoped memory for tpu_custom_call.1']
    #allocation7 [shape = 'u8[32768]{0}', space=vmem, size = 0x8000, scoped, tag = 'input window, operand 2, single buffered']
    #allocation8 [shape = 'u8[32768]{0}', space=vmem, size = 0x8000, scoped, tag = 'input window, operand 4, single buffered']
    #allocation9 [shape = 's32[1]{0}', space=sflag, size = 0x4, scoped, tag = 'scoped memory for tpu_custom_call.1']
    #allocation10 [shape = 'u8[65536]{0}', space=vmem, size = 0x10000, scoped, tag = 'output window, operand 0, single buffered']
    %11 = vsyncpa [#allocation3], 0
    %12 = vsyncpa [#allocation6], 0
    %13 = vsyncpa [#allocation9], 0
    %14 = vsyncpa [#allocation4], 0
    // Predicated region
    $region2: #{tpu_custom_call.1} parent=1 // pred_check
      _
    $region3: #{tpu_custom_call.1} parent=1 // pred_check_branch
      %16 = sbr.rel (0) target = $region5
    $region4: #{tpu_custom_call.1} parent=1 // pred_region
      %s18 = ssub.s32 1024, 1024
      %19 = vsyncadd [#allocation3], %s18
      %s20 = sshll.u32 [#allocation2], 4
      %s21 = int_to_ptr.vmem [resolvable:$true] %s20
      %26 = dma.hbm_to_vmem [thread:$0]  %s0, 1024, %s21, [#allocation3], 64, 64, 4
    $region5: #{tpu_custom_call.1} parent=1 // pred_fallthru
      _
    // Predicated region
    $region6: #{tpu_custom_call.1} parent=1 // pred_check
      _
    $region7: #{tpu_custom_call.1} parent=1 // pred_check_branch
      %28 = sbr.rel (0) target = $region9
    $region8: #{tpu_custom_call.1} parent=1 // pred_region
      %s30 = ssub.s32 1024, 1024
      %31 = vsyncadd [#allocation6], %s30
      %s32 = sshll.u32 [#allocation5], 4
      %s33 = int_to_ptr.vmem [resolvable:$true] %s32
      %38 = dma.hbm_to_vmem [thread:$0]  %s1, 1024, %s33, [#allocation6], 64, 64, 4
    $region9: #{tpu_custom_call.1} parent=1 // pred_fallthru
      _
    // Predicated region
    $region10: #{tpu_custom_call.1} parent=1 // pred_check
      _
    $region11: #{tpu_custom_call.1} parent=1 // pred_check_branch
      %40 = sbr.rel (0) target = $region13
    $region12: #{tpu_custom_call.1} parent=1 // pred_region
      %s42 = ssub.s32 1024, 1024
      %43 = vsyncadd [#allocation6], %s42
      %s44 = sshll.u32 [#allocation7], 4
      %s45 = int_to_ptr.vmem [resolvable:$true] %s44
      %50 = dma.hbm_to_vmem [thread:$0]  %s2, 1024, %s45, [#allocation6], 64, 64, 4
    $region13: #{tpu_custom_call.1} parent=1 // pred_fallthru
      _
    // Predicated region
    $region14: #{tpu_custom_call.1} parent=1 // pred_check
      _
    $region15: #{tpu_custom_call.1} parent=1 // pred_check_branch
      %52 = sbr.rel (0) target = $region17
    $region16: #{tpu_custom_call.1} parent=1 // pred_region
      _
    $region17: #{tpu_custom_call.1} parent=1 // pred_fallthru
      _
    // Predicated region
    $region18: #{tpu_custom_call.1} parent=1 // pred_check
      _
    $region19: #{tpu_custom_call.1} parent=1 // pred_check_branch
      %54 = sbr.rel (0) target = $region21
    $region20: #{tpu_custom_call.1} parent=1 // pred_region
      %s56 = ssub.s32 1024, 1024
      %57 = vsyncadd [#allocation9], %s56
      %s58 = sshll.u32 [#allocation8], 4
      %s59 = int_to_ptr.vmem [resolvable:$true] %s58
      %64 = dma.hbm_to_vmem [thread:$0]  %s4, 1024, %s59, [#allocation9], 64, 64, 4
    $region21: #{tpu_custom_call.1} parent=1 // pred_fallthru
      _
    // Predicated region
    $region22: #{tpu_custom_call.1} parent=1 // pred_check
      _
    $region23: #{tpu_custom_call.1} parent=1 // pred_check_branch
      %66 = sbr.rel (0) target = $region25
    $region24: #{tpu_custom_call.1} parent=1 // pred_region
      _
    $region25: #{tpu_custom_call.1} parent=1 // pred_fallthru
      _
    // Predicated region
    $region26: #{tpu_custom_call.1} parent=1 // pred_check
      _
    $region27: #{tpu_custom_call.1} parent=1 // pred_check_branch
      %68 = sbr.rel (0) target = $region29
    $region28: #{tpu_custom_call.1} parent=1 // pred_region
      %69 = dma.done [#allocation3], 1024
    $region29: #{tpu_custom_call.1} parent=1 // pred_fallthru
      _
    // Predicated region
    $region30: #{tpu_custom_call.1} parent=1 // pred_check
      _
    $region31: #{tpu_custom_call.1} parent=1 // pred_check_branch
      %71 = sbr.rel (0) target = $region33
    $region32: #{tpu_custom_call.1} parent=1 // pred_region
      %72 = dma.done [#allocation6], 1024
    $region33: #{tpu_custom_call.1} parent=1 // pred_fallthru
      _
    // Predicated region
    $region34: #{tpu_custom_call.1} parent=1 // pred_check
      _
    $region35: #{tpu_custom_call.1} parent=1 // pred_check_branch
      %74 = sbr.rel (0) target = $region37
    $region36: #{tpu_custom_call.1} parent=1 // pred_region
      %75 = dma.done [#allocation6], 1024
    $region37: #{tpu_custom_call.1} parent=1 // pred_fallthru
      _
    // Predicated region
    $region38: #{tpu_custom_call.1} parent=1 // pred_check
      _
    $region39: #{tpu_custom_call.1} parent=1 // pred_check_branch
      %77 = sbr.rel (0) target = $region41
    $region40: #{tpu_custom_call.1} parent=1 // pred_region
      %78 = dma.done [#allocation9], 1024
    $region41: #{tpu_custom_call.1} parent=1 // pred_fallthru
      _
    %v80 = vld [vmem:[#allocation2] sm:$0xf]
    %v81 = vld [vmem:[#allocation2 + $0x4] sm:$0xf]
    %v82 = vld [vmem:[#allocation2 + $0x8] sm:$0xf]
    %v83 = vld [vmem:[#allocation2 + $0xc] sm:$0xf]
    %v84 = vld [vmem:[#allocation2 + $0x10] sm:$0xf]
    %v85 = vld [vmem:[#allocation2 + $0x14] sm:$0xf]
    %v86 = vld [vmem:[#allocation2 + $0x18] sm:$0xf]
    %v87 = vld [vmem:[#allocation2 + $0x1c] sm:$0xf]
    %v88 = vld [vmem:[#allocation2 + $0x20] sm:$0xf]
    %v89 = vld [vmem:[#allocation2 + $0x24] sm:$0xf]
    %v90 = vld [vmem:[#allocation2 + $0x28] sm:$0xf]
    %v91 = vld [vmem:[#allocation2 + $0x2c] sm:$0xf]
    %v92 = vld [vmem:[#allocation2 + $0x30] sm:$0xf]
    %v93 = vld [vmem:[#allocation2 + $0x34] sm:$0xf]
    %v94 = vld [vmem:[#allocation2 + $0x38] sm:$0xf]
    %v95 = vld [vmem:[#allocation2 + $0x3c] sm:$0xf]
    %v96 = vld [vmem:[#allocation5] sm:$0xf]
    %v97 = vld [vmem:[#allocation5 + $0x4] sm:$0xf]
    %v98 = vld [vmem:[#allocation5 + $0x8] sm:$0xf]
    %v99 = vld [vmem:[#allocation5 + $0xc] sm:$0xf]
    %v100 = vld [vmem:[#allocation5 + $0x10] sm:$0xf]
    %v101 = vld [vmem:[#allocation5 + $0x14] sm:$0xf]
    %v102 = vld [vmem:[#allocation5 + $0x18] sm:$0xf]
    %v103 = vld [vmem:[#allocation5 + $0x1c] sm:$0xf]
    %v104 = vld [vmem:[#allocation5 + $0x20] sm:$0xf]
    %v105 = vld [vmem:[#allocation5 + $0x24] sm:$0xf]
    %v106 = vld [vmem:[#allocation5 + $0x28] sm:$0xf]
    %v107 = vld [vmem:[#allocation5 + $0x2c] sm:$0xf]
    %v108 = vld [vmem:[#allocation5 + $0x30] sm:$0xf]
    %v109 = vld [vmem:[#allocation5 + $0x34] sm:$0xf]
    %v110 = vld [vmem:[#allocation5 + $0x38] sm:$0xf]
    %v111 = vld [vmem:[#allocation5 + $0x3c] sm:$0xf]
    %v112 = vld [vmem:[#allocation7] sm:$0xf]
    %v113 = vld [vmem:[#allocation7 + $0x4] sm:$0xf]
    %v114 = vld [vmem:[#allocation7 + $0x8] sm:$0xf]
    %v115 = vld [vmem:[#allocation7 + $0xc] sm:$0xf]
    %v116 = vld [vmem:[#allocation7 + $0x10] sm:$0xf]
    %v117 = vld [vmem:[#allocation7 + $0x14] sm:$0xf]
    %v118 = vld [vmem:[#allocation7 + $0x18] sm:$0xf]
    %v119 = vld [vmem:[#allocation7 + $0x1c] sm:$0xf]
    %v120 = vld [vmem:[#allocation7 + $0x20] sm:$0xf]
    %v121 = vld [vmem:[#allocation7 + $0x24] sm:$0xf]
    %v122 = vld [vmem:[#allocation7 + $0x28] sm:$0xf]
    %v123 = vld [vmem:[#allocation7 + $0x2c] sm:$0xf]
    %v124 = vld [vmem:[#allocation7 + $0x30] sm:$0xf]
    %v125 = vld [vmem:[#allocation7 + $0x34] sm:$0xf]
    %v126 = vld [vmem:[#allocation7 + $0x38] sm:$0xf]
    %v127 = vld [vmem:[#allocation7 + $0x3c] sm:$0xf]
    %v144 = vunpack.c.l.b16 %v96
    %v145 = vunpack.c.l.b16 %v97
    %v146 = vunpack.c.l.b16 %v98
    %v147 = vunpack.c.l.b16 %v99
    %v148 = vunpack.c.l.b16 %v100
    %v149 = vunpack.c.l.b16 %v101
    %v150 = vunpack.c.l.b16 %v102
    %v151 = vunpack.c.l.b16 %v103
    %v152 = vunpack.c.l.b16 %v104
    %v153 = vunpack.c.l.b16 %v105
    %v154 = vunpack.c.l.b16 %v106
    %v155 = vunpack.c.l.b16 %v107
    %v156 = vunpack.c.l.b16 %v108
    %v157 = vunpack.c.l.b16 %v109
    %v158 = vunpack.c.l.b16 %v110
    %v159 = vunpack.c.l.b16 %v111
    %v160 = vpack.c.b16 %v145, %v144
    %v161 = vpack.c.b16 %v147, %v146
    %v162 = vpack.c.b16 %v149, %v148
    %v163 = vpack.c.b16 %v151, %v150
    %v164 = vpack.c.b16 %v153, %v152
    %v165 = vpack.c.b16 %v155, %v154
    %v166 = vpack.c.b16 %v157, %v156
    %v167 = vpack.c.b16 %v159, %v158
    %v192 = vunpack.c.l.b16 %v112
    %v193 = vunpack.c.l.b16 %v113
    %v194 = vunpack.c.l.b16 %v114
    %v195 = vunpack.c.l.b16 %v115
    %v196 = vunpack.c.l.b16 %v116
    %v197 = vunpack.c.l.b16 %v117
    %v198 = vunpack.c.l.b16 %v118
    %v199 = vunpack.c.l.b16 %v119
    %v200 = vunpack.c.l.b16 %v120
    %v201 = vunpack.c.l.b16 %v121
    %v202 = vunpack.c.l.b16 %v122
    %v203 = vunpack.c.l.b16 %v123
    %v204 = vunpack.c.l.b16 %v124
    %v205 = vunpack.c.l.b16 %v125
    %v206 = vunpack.c.l.b16 %v126
    %v207 = vunpack.c.l.b16 %v127
    %v208 = vpack.c.b16 %v193, %v192
    %v209 = vpack.c.b16 %v195, %v194
    %v210 = vpack.c.b16 %v197, %v196
    %v211 = vpack.c.b16 %v199, %v198
    %v212 = vpack.c.b16 %v201, %v200
    %v213 = vpack.c.b16 %v203, %v202
    %v214 = vpack.c.b16 %v205, %v204
    %v215 = vpack.c.b16 %v207, %v206
    %224 = vmatprep.subr.bf16.mxu0 0
    %225 = vmatpush1.bf16.msra.mxu0 %v215
    %226 = vmatprep.subr.bf16.mxu0 0
    %227 = vmatpush1.bf16.msra.mxu0 %v214
    %228 = vmatprep.subr.bf16.mxu0 0
    %229 = vmatpush1.bf16.msra.mxu0 %v213
    %230 = vmatprep.subr.bf16.mxu0 0
    %231 = vmatpush1.bf16.msra.mxu0 %v212
    %232 = vmatprep.subr.bf16.mxu0 0
    %233 = vmatpush1.bf16.msra.mxu0 %v211
    %234 = vmatprep.subr.bf16.mxu0 0
    %235 = vmatpush1.bf16.msra.mxu0 %v210
    %236 = vmatprep.subr.bf16.mxu0 0
    %237 = vmatpush1.bf16.msra.mxu0 %v209
    %238 = vmatprep.subr.bf16.mxu0 0
    %239 = vmatpush1.bf16.msra.mxu0 %v208
    %240 = vmatprep.subr.bf16.mxu0 0
    %241 = vmatpush2.bf16.msra.mxu0 0
    %242 = vmatprep.subr.bf16.mxu0 0
    %243 = vmatpush2.bf16.msra.mxu0 0
    %244 = vmatprep.subr.bf16.mxu0 0
    %245 = vmatpush2.bf16.msra.mxu0 0
    %246 = vmatprep.subr.bf16.mxu0 0
    %247 = vmatpush2.bf16.msra.mxu0 0
    %248 = vmatprep.subr.bf16.mxu0 0
    %249 = vmatpush2.bf16.msra.mxu0 0
    %250 = vmatprep.subr.bf16.mxu0 0
    %251 = vmatpush2.bf16.msra.mxu0 0
    %252 = vmatprep.subr.bf16.mxu0 0
    %253 = vmatpush2.bf16.msra.mxu0 0
    %254 = vmatprep.subr.bf16.mxu0 0
    %255 = vmatpush2.bf16.msra.mxu0 0
    %256 = vmatprep.mubr.bf16.mxu0 0
    %257 = vmatmul.mubr.bf16.gmra.mxu0 %v160
    %v258 = vpop.f32.mrf.mxu0
    %v259 = vadd.f32 0.0, %v258
    %v260 = vpop.f32.mrf.mxu0
    %v261 = vpop.f32.mrf.mxu0
    %v262 = vadd.f32 0.0, %v261
    %v263 = vpop.f32.mrf.mxu0
    %264 = vmatprep.mubr.bf16.mxu0 0
    %265 = vmatmul.mubr.bf16.gmra.mxu0 %v161
    %v266 = vpop.f32.mrf.mxu0
    %v267 = vadd.f32 0.0, %v266
    %v268 = vpop.f32.mrf.mxu0
    %v269 = vpop.f32.mrf.mxu0
    %v270 = vadd.f32 0.0, %v269
    %v271 = vpop.f32.mrf.mxu0
    %272 = vmatprep.mubr.bf16.mxu0 0
    %273 = vmatmul.mubr.bf16.gmra.mxu0 %v162
    %v274 = vpop.f32.mrf.mxu0
    %v275 = vadd.f32 0.0, %v274
    %v276 = vpop.f32.mrf.mxu0
    %v277 = vpop.f32.mrf.mxu0
    %v278 = vadd.f32 0.0, %v277
    %v279 = vpop.f32.mrf.mxu0
    %280 = vmatprep.mubr.bf16.mxu0 0
    %281 = vmatmul.mubr.bf16.gmra.mxu0 %v163
    %v282 = vpop.f32.mrf.mxu0
    %v283 = vadd.f32 0.0, %v282
    %v284 = vpop.f32.mrf.mxu0
    %v285 = vpop.f32.mrf.mxu0
    %v286 = vadd.f32 0.0, %v285
    %v287 = vpop.f32.mrf.mxu0
    %288 = vmatprep.mubr.bf16.mxu0 0
    %289 = vmatmul.mubr.bf16.gmra.mxu0 %v164
    %v290 = vpop.f32.mrf.mxu0
    %v291 = vadd.f32 0.0, %v290
    %v292 = vpop.f32.mrf.mxu0
    %v293 = vpop.f32.mrf.mxu0
    %v294 = vadd.f32 0.0, %v293
    %v295 = vpop.f32.mrf.mxu0
    %296 = vmatprep.mubr.bf16.mxu0 0
    %297 = vmatmul.mubr.bf16.gmra.mxu0 %v165
    %v298 = vpop.f32.mrf.mxu0
    %v299 = vadd.f32 0.0, %v298
    %v300 = vpop.f32.mrf.mxu0
    %v301 = vpop.f32.mrf.mxu0
    %v302 = vadd.f32 0.0, %v301
    %v303 = vpop.f32.mrf.mxu0
    %304 = vmatprep.mubr.bf16.mxu0 0
    %305 = vmatmul.mubr.bf16.gmra.mxu0 %v166
    %v306 = vpop.f32.mrf.mxu0
    %v307 = vadd.f32 0.0, %v306
    %v308 = vpop.f32.mrf.mxu0
    %v309 = vpop.f32.mrf.mxu0
    %v310 = vadd.f32 0.0, %v309
    %v311 = vpop.f32.mrf.mxu0
    %312 = vmatprep.mubr.bf16.mxu0 0
    %313 = vmatmul.mubr.bf16.gmra.mxu0 %v167
    %v314 = vpop.f32.mrf.mxu0
    %v315 = vadd.f32 0.0, %v314
    %v316 = vpop.f32.mrf.mxu0
    %v317 = vpop.f32.mrf.mxu0
    %v318 = vadd.f32 0.0, %v317
    %v319 = vpop.f32.mrf.mxu0
    %320 = vdwg.mxu0
    %v321 = vpack.c.bf16 %v262, %v259
    %v322 = vpack.c.bf16 %v270, %v267
    %v323 = vpack.c.bf16 %v278, %v275
    %v324 = vpack.c.bf16 %v286, %v283
    %v325 = vpack.c.bf16 %v294, %v291
    %v326 = vpack.c.bf16 %v302, %v299
    %v327 = vpack.c.bf16 %v310, %v307
    %v328 = vpack.c.bf16 %v318, %v315
    %v329 = vld [vmem:[%s3] sm:$0x1]
    %v331 = vlaneseq
    %v332 = vshrl.u32 %v331, 7
    %v333 = vsub.s32 0, %v332
    %v334 = vrot.slane %v329, %v333
    %v352 = vunpack.c.l.b16 %v80
    %v353 = vunpack.c.l.b16 %v81
    %v354 = vunpack.c.l.b16 %v82
    %v355 = vunpack.c.l.b16 %v83
    %v356 = vunpack.c.l.b16 %v84
    %v357 = vunpack.c.l.b16 %v85
    %v358 = vunpack.c.l.b16 %v86
    %v359 = vunpack.c.l.b16 %v87
    %v360 = vunpack.c.l.b16 %v88
    %v361 = vunpack.c.l.b16 %v89
    %v362 = vunpack.c.l.b16 %v90
    %v363 = vunpack.c.l.b16 %v91
    %v364 = vunpack.c.l.b16 %v92
    %v365 = vunpack.c.l.b16 %v93
    %v366 = vunpack.c.l.b16 %v94
    %v367 = vunpack.c.l.b16 %v95
    %v368 = vpack.c.b16 %v353, %v352
    %v369 = vpack.c.b16 %v355, %v354
    %v370 = vpack.c.b16 %v357, %v356
    %v371 = vpack.c.b16 %v359, %v358
    %v372 = vpack.c.b16 %v361, %v360
    %v373 = vpack.c.b16 %v363, %v362
    %v374 = vpack.c.b16 %v365, %v364
    %v375 = vpack.c.b16 %v367, %v366
    %384 = vmatprep.subr.bf16.mxu0 0
    %385 = vmatpush1.bf16.msra.mxu0 %v328
    %386 = vmatprep.subr.bf16.mxu0 0
    %387 = vmatpush1.bf16.msra.mxu0 %v327
    %388 = vmatprep.subr.bf16.mxu0 0
    %389 = vmatpush1.bf16.msra.mxu0 %v326
    %390 = vmatprep.subr.bf16.mxu0 0
    %391 = vmatpush1.bf16.msra.mxu0 %v325
    %392 = vmatprep.subr.bf16.mxu0 0
    %393 = vmatpush1.bf16.msra.mxu0 %v324
    %394 = vmatprep.subr.bf16.mxu0 0
    %395 = vmatpush1.bf16.msra.mxu0 %v323
    %396 = vmatprep.subr.bf16.mxu0 0
    %397 = vmatpush1.bf16.msra.mxu0 %v322
    %398 = vmatprep.subr.bf16.mxu0 0
    %399 = vmatpush1.bf16.msra.mxu0 %v321
    %400 = vmatprep.subr.bf16.mxu0 0
    %401 = vmatpush2.bf16.msra.mxu0 0
    %402 = vmatprep.subr.bf16.mxu0 0
    %403 = vmatpush2.bf16.msra.mxu0 0
    %404 = vmatprep.subr.bf16.mxu0 0
    %405 = vmatpush2.bf16.msra.mxu0 0
    %406 = vmatprep.subr.bf16.mxu0 0
    %407 = vmatpush2.bf16.msra.mxu0 0
    %408 = vmatprep.subr.bf16.mxu0 0
    %409 = vmatpush2.bf16.msra.mxu0 0
    %410 = vmatprep.subr.bf16.mxu0 0
    %411 = vmatpush2.bf16.msra.mxu0 0
    %412 = vmatprep.subr.bf16.mxu0 0
    %413 = vmatpush2.bf16.msra.mxu0 0
    %414 = vmatprep.subr.bf16.mxu0 0
    %415 = vmatpush2.bf16.msra.mxu0 0
    %416 = vmatprep.mubr.bf16.mxu0 0
    %417 = vmatmul.mubr.bf16.gmra.mxu0 %v368
    %v418 = vpop.f32.mrf.mxu0
    %v419 = vadd.f32 %v334, %v418
    %v420 = vpop.f32.mrf.mxu0
    %v421 = vpop.f32.mrf.mxu0
    %v422 = vadd.f32 %v334, %v421
    %v423 = vpop.f32.mrf.mxu0
    %424 = vmatprep.mubr.bf16.mxu0 0
    %425 = vmatmul.mubr.bf16.gmra.mxu0 %v369
    %v426 = vpop.f32.mrf.mxu0
    %v427 = vadd.f32 %v334, %v426
    %v428 = vpop.f32.mrf.mxu0
    %v429 = vpop.f32.mrf.mxu0
    %v430 = vadd.f32 %v334, %v429
    %v431 = vpop.f32.mrf.mxu0
    %432 = vmatprep.mubr.bf16.mxu0 0
    %433 = vmatmul.mubr.bf16.gmra.mxu0 %v370
    %v434 = vpop.f32.mrf.mxu0
    %v435 = vadd.f32 %v334, %v434
    %v436 = vpop.f32.mrf.mxu0
    %v437 = vpop.f32.mrf.mxu0
    %v438 = vadd.f32 %v334, %v437
    %v439 = vpop.f32.mrf.mxu0
    %440 = vmatprep.mubr.bf16.mxu0 0
    %441 = vmatmul.mubr.bf16.gmra.mxu0 %v371
    %v442 = vpop.f32.mrf.mxu0
    %v443 = vadd.f32 %v334, %v442
    %v444 = vpop.f32.mrf.mxu0
    %v445 = vpop.f32.mrf.mxu0
    %v446 = vadd.f32 %v334, %v445
    %v447 = vpop.f32.mrf.mxu0
    %448 = vmatprep.mubr.bf16.mxu0 0
    %449 = vmatmul.mubr.bf16.gmra.mxu0 %v372
    %v450 = vpop.f32.mrf.mxu0
    %v451 = vadd.f32 %v334, %v450
    %v452 = vpop.f32.mrf.mxu0
    %v453 = vpop.f32.mrf.mxu0
    %v454 = vadd.f32 %v334, %v453
    %v455 = vpop.f32.mrf.mxu0
    %456 = vmatprep.mubr.bf16.mxu0 0
    %457 = vmatmul.mubr.bf16.gmra.mxu0 %v373
    %v458 = vpop.f32.mrf.mxu0
    %v459 = vadd.f32 %v334, %v458
    %v460 = vpop.f32.mrf.mxu0
    %v461 = vpop.f32.mrf.mxu0
    %v462 = vadd.f32 %v334, %v461
    %v463 = vpop.f32.mrf.mxu0
    %464 = vmatprep.mubr.bf16.mxu0 0
    %465 = vmatmul.mubr.bf16.gmra.mxu0 %v374
    %v466 = vpop.f32.mrf.mxu0
    %v467 = vadd.f32 %v334, %v466
    %v468 = vpop.f32.mrf.mxu0
    %v469 = vpop.f32.mrf.mxu0
    %v470 = vadd.f32 %v334, %v469
    %v471 = vpop.f32.mrf.mxu0
    %472 = vmatprep.mubr.bf16.mxu0 0
    %473 = vmatmul.mubr.bf16.gmra.mxu0 %v375
    %v474 = vpop.f32.mrf.mxu0
    %v475 = vadd.f32 %v334, %v474
    %v476 = vpop.f32.mrf.mxu0
    %v477 = vpop.f32.mrf.mxu0
    %v478 = vadd.f32 %v334, %v477
    %v479 = vpop.f32.mrf.mxu0
    %480 = vdwg.mxu0
    %v481 = vmax.f32 %v419, 0.0
    %v482 = vmax.f32 %v422, 0.0
    %v483 = vmax.f32 %v427, 0.0
    %v484 = vmax.f32 %v430, 0.0
    %v485 = vmax.f32 %v435, 0.0
    %v486 = vmax.f32 %v438, 0.0
    %v487 = vmax.f32 %v443, 0.0
    %v488 = vmax.f32 %v446, 0.0
    %v489 = vmax.f32 %v451, 0.0
    %v490 = vmax.f32 %v454, 0.0
    %v491 = vmax.f32 %v459, 0.0
    %v492 = vmax.f32 %v462, 0.0
    %v493 = vmax.f32 %v467, 0.0
    %v494 = vmax.f32 %v470, 0.0
    %v495 = vmax.f32 %v475, 0.0
    %v496 = vmax.f32 %v478, 0.0
    %v497 = vpack.c.bf16 %v482, %v481
    %v498 = vpack.c.bf16 %v484, %v483
    %v499 = vpack.c.bf16 %v486, %v485
    %v500 = vpack.c.bf16 %v488, %v487
    %v501 = vpack.c.bf16 %v490, %v489
    %v502 = vpack.c.bf16 %v492, %v491
    %v503 = vpack.c.bf16 %v494, %v493
    %v504 = vpack.c.bf16 %v496, %v495
    %v505 = vld [vmem:[#allocation8] sm:$0xf]
    %v506 = vld [vmem:[#allocation8 + $0x4] sm:$0xf]
    %v507 = vld [vmem:[#allocation8 + $0x8] sm:$0xf]
    %v508 = vld [vmem:[#allocation8 + $0xc] sm:$0xf]
    %v509 = vld [vmem:[#allocation8 + $0x10] sm:$0xf]
    %v510 = vld [vmem:[#allocation8 + $0x14] sm:$0xf]
    %v511 = vld [vmem:[#allocation8 + $0x18] sm:$0xf]
    %v512 = vld [vmem:[#allocation8 + $0x1c] sm:$0xf]
    %v513 = vld [vmem:[#allocation8 + $0x20] sm:$0xf]
    %v514 = vld [vmem:[#allocation8 + $0x24] sm:$0xf]
    %v515 = vld [vmem:[#allocation8 + $0x28] sm:$0xf]
    %v516 = vld [vmem:[#allocation8 + $0x2c] sm:$0xf]
    %v517 = vld [vmem:[#allocation8 + $0x30] sm:$0xf]
    %v518 = vld [vmem:[#allocation8 + $0x34] sm:$0xf]
    %v519 = vld [vmem:[#allocation8 + $0x38] sm:$0xf]
    %v520 = vld [vmem:[#allocation8 + $0x3c] sm:$0xf]
    %v537 = vunpack.c.l.b16 %v505
    %v538 = vunpack.c.l.b16 %v506
    %v539 = vunpack.c.l.b16 %v507
    %v540 = vunpack.c.l.b16 %v508
    %v541 = vunpack.c.l.b16 %v509
    %v542 = vunpack.c.l.b16 %v510
    %v543 = vunpack.c.l.b16 %v511
    %v544 = vunpack.c.l.b16 %v512
    %v545 = vunpack.c.l.b16 %v513
    %v546 = vunpack.c.l.b16 %v514
    %v547 = vunpack.c.l.b16 %v515
    %v548 = vunpack.c.l.b16 %v516
    %v549 = vunpack.c.l.b16 %v517
    %v550 = vunpack.c.l.b16 %v518
    %v551 = vunpack.c.l.b16 %v519
    %v552 = vunpack.c.l.b16 %v520
    %v553 = vpack.c.b16 %v538, %v537
    %v554 = vpack.c.b16 %v540, %v539
    %v555 = vpack.c.b16 %v542, %v541
    %v556 = vpack.c.b16 %v544, %v543
    %v557 = vpack.c.b16 %v546, %v545
    %v558 = vpack.c.b16 %v548, %v547
    %v559 = vpack.c.b16 %v550, %v549
    %v560 = vpack.c.b16 %v552, %v551
    %569 = vmatprep.subr.bf16.mxu0 0
    %570 = vmatpush1.bf16.msra.mxu0 %v560
    %571 = vmatprep.subr.bf16.mxu0 0
    %572 = vmatpush1.bf16.msra.mxu0 %v559
    %573 = vmatprep.subr.bf16.mxu0 0
    %574 = vmatpush1.bf16.msra.mxu0 %v558
    %575 = vmatprep.subr.bf16.mxu0 0
    %576 = vmatpush1.bf16.msra.mxu0 %v557
    %577 = vmatprep.subr.bf16.mxu0 0
    %578 = vmatpush1.bf16.msra.mxu0 %v556
    %579 = vmatprep.subr.bf16.mxu0 0
    %580 = vmatpush1.bf16.msra.mxu0 %v555
    %581 = vmatprep.subr.bf16.mxu0 0
    %582 = vmatpush1.bf16.msra.mxu0 %v554
    %583 = vmatprep.subr.bf16.mxu0 0
    %584 = vmatpush1.bf16.msra.mxu0 %v553
    %585 = vmatprep.subr.bf16.mxu0 0
    %586 = vmatpush2.bf16.msra.mxu0 0
    %587 = vmatprep.subr.bf16.mxu0 0
    %588 = vmatpush2.bf16.msra.mxu0 0
    %589 = vmatprep.subr.bf16.mxu0 0
    %590 = vmatpush2.bf16.msra.mxu0 0
    %591 = vmatprep.subr.bf16.mxu0 0
    %592 = vmatpush2.bf16.msra.mxu0 0
    %593 = vmatprep.subr.bf16.mxu0 0
    %594 = vmatpush2.bf16.msra.mxu0 0
    %595 = vmatprep.subr.bf16.mxu0 0
    %596 = vmatpush2.bf16.msra.mxu0 0
    %597 = vmatprep.subr.bf16.mxu0 0
    %598 = vmatpush2.bf16.msra.mxu0 0
    %599 = vmatprep.subr.bf16.mxu0 0
    %600 = vmatpush2.bf16.msra.mxu0 0
    %601 = vmatprep.mubr.bf16.mxu0 0
    %602 = vmatmul.mubr.bf16.gmra.mxu0 %v497
    %v603 = vpop.f32.mrf.mxu0
    %v604 = vadd.f32 0.0, %v603
    %v605 = vpop.f32.mrf.mxu0
    %v606 = vpop.f32.mrf.mxu0
    %v607 = vadd.f32 0.0, %v606
    %v608 = vpop.f32.mrf.mxu0
    %609 = vmatprep.mubr.bf16.mxu0 0
    %610 = vmatmul.mubr.bf16.gmra.mxu0 %v498
    %v611 = vpop.f32.mrf.mxu0
    %v612 = vadd.f32 0.0, %v611
    %v613 = vpop.f32.mrf.mxu0
    %v614 = vpop.f32.mrf.mxu0
    %v615 = vadd.f32 0.0, %v614
    %v616 = vpop.f32.mrf.mxu0
    %617 = vmatprep.mubr.bf16.mxu0 0
    %618 = vmatmul.mubr.bf16.gmra.mxu0 %v499
    %v619 = vpop.f32.mrf.mxu0
    %v620 = vadd.f32 0.0, %v619
    %v621 = vpop.f32.mrf.mxu0
    %v622 = vpop.f32.mrf.mxu0
    %v623 = vadd.f32 0.0, %v622
    %v624 = vpop.f32.mrf.mxu0
    %625 = vmatprep.mubr.bf16.mxu0 0
    %626 = vmatmul.mubr.bf16.gmra.mxu0 %v500
    %v627 = vpop.f32.mrf.mxu0
    %v628 = vadd.f32 0.0, %v627
    %v629 = vpop.f32.mrf.mxu0
    %v630 = vpop.f32.mrf.mxu0
    %v631 = vadd.f32 0.0, %v630
    %v632 = vpop.f32.mrf.mxu0
    %633 = vmatprep.mubr.bf16.mxu0 0
    %634 = vmatmul.mubr.bf16.gmra.mxu0 %v501
    %v635 = vpop.f32.mrf.mxu0
    %v636 = vadd.f32 0.0, %v635
    %v637 = vpop.f32.mrf.mxu0
    %v638 = vpop.f32.mrf.mxu0
    %v639 = vadd.f32 0.0, %v638
    %v640 = vpop.f32.mrf.mxu0
    %641 = vmatprep.mubr.bf16.mxu0 0
    %642 = vmatmul.mubr.bf16.gmra.mxu0 %v502
    %v643 = vpop.f32.mrf.mxu0
    %v644 = vadd.f32 0.0, %v643
    %v645 = vpop.f32.mrf.mxu0
    %v646 = vpop.f32.mrf.mxu0
    %v647 = vadd.f32 0.0, %v646
    %v648 = vpop.f32.mrf.mxu0
    %649 = vmatprep.mubr.bf16.mxu0 0
    %650 = vmatmul.mubr.bf16.gmra.mxu0 %v503
    %v651 = vpop.f32.mrf.mxu0
    %v652 = vadd.f32 0.0, %v651
    %v653 = vpop.f32.mrf.mxu0
    %v654 = vpop.f32.mrf.mxu0
    %v655 = vadd.f32 0.0, %v654
    %v656 = vpop.f32.mrf.mxu0
    %657 = vmatprep.mubr.bf16.mxu0 0
    %658 = vmatmul.mubr.bf16.gmra.mxu0 %v504
    %v659 = vpop.f32.mrf.mxu0
    %v660 = vadd.f32 0.0, %v659
    %v661 = vpop.f32.mrf.mxu0
    %v662 = vpop.f32.mrf.mxu0
    %v663 = vadd.f32 0.0, %v662
    %v664 = vpop.f32.mrf.mxu0
    %665 = vdwg.mxu0
    %v666 = vpack.c.bf16 %v607, %v604
    %v667 = vpack.c.bf16 %v615, %v612
    %v668 = vpack.c.bf16 %v623, %v620
    %v669 = vpack.c.bf16 %v631, %v628
    %v670 = vpack.c.bf16 %v639, %v636
    %v671 = vpack.c.bf16 %v647, %v644
    %v672 = vpack.c.bf16 %v655, %v652
    %v673 = vpack.c.bf16 %v663, %v660
    %v674 = vld [vmem:[%s5] sm:$0x1]
    %v676 = vlaneseq
    %v677 = vshrl.u32 %v676, 7
    %v678 = vsub.s32 0, %v677
    %v679 = vrot.slane %v674, %v678
    %681 = vmatprep.subr.bf16.mxu0 0
    %682 = vmatpush1.bf16.msra.mxu0 %v673
    %683 = vmatprep.subr.bf16.mxu0 0
    %684 = vmatpush1.bf16.msra.mxu0 %v672
    %685 = vmatprep.subr.bf16.mxu0 0
    %686 = vmatpush1.bf16.msra.mxu0 %v671
    %687 = vmatprep.subr.bf16.mxu0 0
    %688 = vmatpush1.bf16.msra.mxu0 %v670
    %689 = vmatprep.subr.bf16.mxu0 0
    %690 = vmatpush1.bf16.msra.mxu0 %v669
    %691 = vmatprep.subr.bf16.mxu0 0
    %692 = vmatpush1.bf16.msra.mxu0 %v668
    %693 = vmatprep.subr.bf16.mxu0 0
    %694 = vmatpush1.bf16.msra.mxu0 %v667
    %695 = vmatprep.subr.bf16.mxu0 0
    %696 = vmatpush1.bf16.msra.mxu0 %v666
    %697 = vmatprep.subr.bf16.mxu0 0
    %698 = vmatpush2.bf16.msra.mxu0 0
    %699 = vmatprep.subr.bf16.mxu0 0
    %700 = vmatpush2.bf16.msra.mxu0 0
    %701 = vmatprep.subr.bf16.mxu0 0
    %702 = vmatpush2.bf16.msra.mxu0 0
    %703 = vmatprep.subr.bf16.mxu0 0
    %704 = vmatpush2.bf16.msra.mxu0 0
    %705 = vmatprep.subr.bf16.mxu0 0
    %706 = vmatpush2.bf16.msra.mxu0 0
    %707 = vmatprep.subr.bf16.mxu0 0
    %708 = vmatpush2.bf16.msra.mxu0 0
    %709 = vmatprep.subr.bf16.mxu0 0
    %710 = vmatpush2.bf16.msra.mxu0 0
    %711 = vmatprep.subr.bf16.mxu0 0
    %712 = vmatpush2.bf16.msra.mxu0 0
    %713 = vmatprep.mubr.bf16.mxu0 0
    %714 = vmatmul.mubr.bf16.gmra.mxu0 %v368
    %v715 = vpop.f32.mrf.mxu0
    %v716 = vadd.f32 %v679, %v715
    %v717 = vpop.f32.mrf.mxu0
    %v718 = vpop.f32.mrf.mxu0
    %v719 = vadd.f32 %v679, %v718
    %v720 = vpop.f32.mrf.mxu0
    %721 = vmatprep.mubr.bf16.mxu0 0
    %722 = vmatmul.mubr.bf16.gmra.mxu0 %v369
    %v723 = vpop.f32.mrf.mxu0
    %v724 = vadd.f32 %v679, %v723
    %v725 = vpop.f32.mrf.mxu0
    %v726 = vpop.f32.mrf.mxu0
    %v727 = vadd.f32 %v679, %v726
    %v728 = vpop.f32.mrf.mxu0
    %729 = vmatprep.mubr.bf16.mxu0 0
    %730 = vmatmul.mubr.bf16.gmra.mxu0 %v370
    %v731 = vpop.f32.mrf.mxu0
    %v732 = vadd.f32 %v679, %v731
    %v733 = vpop.f32.mrf.mxu0
    %v734 = vpop.f32.mrf.mxu0
    %v735 = vadd.f32 %v679, %v734
    %v736 = vpop.f32.mrf.mxu0
    %737 = vmatprep.mubr.bf16.mxu0 0
    %738 = vmatmul.mubr.bf16.gmra.mxu0 %v371
    %v739 = vpop.f32.mrf.mxu0
    %v740 = vadd.f32 %v679, %v739
    %v741 = vpop.f32.mrf.mxu0
    %v742 = vpop.f32.mrf.mxu0
    %v743 = vadd.f32 %v679, %v742
    %v744 = vpop.f32.mrf.mxu0
    %745 = vmatprep.mubr.bf16.mxu0 0
    %746 = vmatmul.mubr.bf16.gmra.mxu0 %v372
    %v747 = vpop.f32.mrf.mxu0
    %v748 = vadd.f32 %v679, %v747
    %v749 = vpop.f32.mrf.mxu0
    %v750 = vpop.f32.mrf.mxu0
    %v751 = vadd.f32 %v679, %v750
    %v752 = vpop.f32.mrf.mxu0
    %753 = vmatprep.mubr.bf16.mxu0 0
    %754 = vmatmul.mubr.bf16.gmra.mxu0 %v373
    %v755 = vpop.f32.mrf.mxu0
    %v756 = vadd.f32 %v679, %v755
    %v757 = vpop.f32.mrf.mxu0
    %v758 = vpop.f32.mrf.mxu0
    %v759 = vadd.f32 %v679, %v758
    %v760 = vpop.f32.mrf.mxu0
    %761 = vmatprep.mubr.bf16.mxu0 0
    %762 = vmatmul.mubr.bf16.gmra.mxu0 %v374
    %v763 = vpop.f32.mrf.mxu0
    %v764 = vadd.f32 %v679, %v763
    %v765 = vpop.f32.mrf.mxu0
    %v766 = vpop.f32.mrf.mxu0
    %v767 = vadd.f32 %v679, %v766
    %v768 = vpop.f32.mrf.mxu0
    %769 = vmatprep.mubr.bf16.mxu0 0
    %770 = vmatmul.mubr.bf16.gmra.mxu0 %v375
    %v771 = vpop.f32.mrf.mxu0
    %v772 = vadd.f32 %v679, %v771
    %v773 = vpop.f32.mrf.mxu0
    %v774 = vpop.f32.mrf.mxu0
    %v775 = vadd.f32 %v679, %v774
    %v776 = vpop.f32.mrf.mxu0
    %777 = vdwg.mxu0
    %v778 = vsub.f32 0.0, %v716
    %v779 = vsub.f32 0.0, %v719
    %v780 = vsub.f32 0.0, %v724
    %v781 = vsub.f32 0.0, %v727
    %v782 = vsub.f32 0.0, %v732
    %v783 = vsub.f32 0.0, %v735
    %v784 = vsub.f32 0.0, %v740
    %v785 = vsub.f32 0.0, %v743
    %v786 = vsub.f32 0.0, %v748
    %v787 = vsub.f32 0.0, %v751
    %v788 = vsub.f32 0.0, %v756
    %v789 = vsub.f32 0.0, %v759
    %v790 = vsub.f32 0.0, %v764
    %v791 = vsub.f32 0.0, %v767
    %v792 = vsub.f32 0.0, %v772
    %v793 = vsub.f32 0.0, %v775
    %v794 = vmul.f32 %v778, 1.442695
    %v795 = vpow.pop %v794
    %v796 = vmul.f32 %v779, 1.442695
    %v797 = vpow.pop %v796
    %v798 = vmul.f32 %v780, 1.442695
    %v799 = vpow.pop %v798
    %v800 = vmul.f32 %v781, 1.442695
    %v801 = vpow.pop %v800
    %v802 = vmul.f32 %v782, 1.442695
    %v803 = vpow.pop %v802
    %v804 = vmul.f32 %v783, 1.442695
    %v805 = vpow.pop %v804
    %v806 = vmul.f32 %v784, 1.442695
    %v807 = vpow.pop %v806
    %v808 = vmul.f32 %v785, 1.442695
    %v809 = vpow.pop %v808
    %v810 = vmul.f32 %v786, 1.442695
    %v811 = vpow.pop %v810
    %v812 = vmul.f32 %v787, 1.442695
    %v813 = vpow.pop %v812
    %v814 = vmul.f32 %v788, 1.442695
    %v815 = vpow.pop %v814
    %v816 = vmul.f32 %v789, 1.442695
    %v817 = vpow.pop %v816
    %v818 = vmul.f32 %v790, 1.442695
    %v819 = vpow.pop %v818
    %v820 = vmul.f32 %v791, 1.442695
    %v821 = vpow.pop %v820
    %v822 = vmul.f32 %v792, 1.442695
    %v823 = vpow.pop %v822
    %v824 = vmul.f32 %v793, 1.442695
    %v825 = vpow.pop %v824
    %v826 = vadd.f32 %v795, 1.0
    %v827 = vadd.f32 %v797, 1.0
    %v828 = vadd.f32 %v799, 1.0
    %v829 = vadd.f32 %v801, 1.0
    %v830 = vadd.f32 %v803, 1.0
    %v831 = vadd.f32 %v805, 1.0
    %v832 = vadd.f32 %v807, 1.0
    %v833 = vadd.f32 %v809, 1.0
    %v834 = vadd.f32 %v811, 1.0
    %v835 = vadd.f32 %v813, 1.0
    %v836 = vadd.f32 %v815, 1.0
    %v837 = vadd.f32 %v817, 1.0
    %v838 = vadd.f32 %v819, 1.0
    %v839 = vadd.f32 %v821, 1.0
    %v840 = vadd.f32 %v823, 1.0
    %v841 = vadd.f32 %v825, 1.0
    %v842 = vrcp.pop %v826
    %v843 = vmul.f32 1.0, %v842
    %v844 = vrcp.pop %v827
    %v845 = vmul.f32 1.0, %v844
    %v846 = vrcp.pop %v828
    %v847 = vmul.f32 1.0, %v846
    %v848 = vrcp.pop %v829
    %v849 = vmul.f32 1.0, %v848
    %v850 = vrcp.pop %v830
    %v851 = vmul.f32 1.0, %v850
    %v852 = vrcp.pop %v831
    %v853 = vmul.f32 1.0, %v852
    %v854 = vrcp.pop %v832
    %v855 = vmul.f32 1.0, %v854
    %v856 = vrcp.pop %v833
    %v857 = vmul.f32 1.0, %v856
    %v858 = vrcp.pop %v834
    %v859 = vmul.f32 1.0, %v858
    %v860 = vrcp.pop %v835
    %v861 = vmul.f32 1.0, %v860
    %v862 = vrcp.pop %v836
    %v863 = vmul.f32 1.0, %v862
    %v864 = vrcp.pop %v837
    %v865 = vmul.f32 1.0, %v864
    %v866 = vrcp.pop %v838
    %v867 = vmul.f32 1.0, %v866
    %v868 = vrcp.pop %v839
    %v869 = vmul.f32 1.0, %v868
    %v870 = vrcp.pop %v840
    %v871 = vmul.f32 1.0, %v870
    %v872 = vrcp.pop %v841
    %v873 = vmul.f32 1.0, %v872
    %v874 = vlaneseq
    %v875 = vand.u32 %v874, 127
    %vm876 = vcmp.ge.s32.totalorder %v875, 11
    %vm877 = vcmp.lt.s32.totalorder %v875, 16
    %vm878 = vmand %vm876, %vm877
    %v879 = vsel %vm878, 1.0, %v843
    %v880 = vsel %vm878, 1.0, %v845
    %v881 = vsel %vm878, 1.0, %v847
    %v882 = vsel %vm878, 1.0, %v849
    %v883 = vsel %vm878, 1.0, %v851
    %v884 = vsel %vm878, 1.0, %v853
    %v885 = vsel %vm878, 1.0, %v855
    %v886 = vsel %vm878, 1.0, %v857
    %v887 = vsel %vm878, 1.0, %v859
    %v888 = vsel %vm878, 1.0, %v861
    %v889 = vsel %vm878, 1.0, %v863
    %v890 = vsel %vm878, 1.0, %v865
    %v891 = vsel %vm878, 1.0, %v867
    %v892 = vsel %vm878, 1.0, %v869
    %v893 = vsel %vm878, 1.0, %v871
    %v894 = vsel %vm878, 1.0, %v873
    %895 = vst [vmem:[#allocation10] sm:$0xff] %v879
    %896 = vst [vmem:[#allocation10 + $0x8] sm:$0xff] %v880
    %897 = vst [vmem:[#allocation10 + $0x10] sm:$0xff] %v881
    %898 = vst [vmem:[#allocation10 + $0x18] sm:$0xff] %v882
    %899 = vst [vmem:[#allocation10 + $0x20] sm:$0xff] %v883
    %900 = vst [vmem:[#allocation10 + $0x28] sm:$0xff] %v884
    %901 = vst [vmem:[#allocation10 + $0x30] sm:$0xff] %v885
    %902 = vst [vmem:[#allocation10 + $0x38] sm:$0xff] %v886
    %903 = vst [vmem:[#allocation10 + $0x40] sm:$0xff] %v887
    %904 = vst [vmem:[#allocation10 + $0x48] sm:$0xff] %v888
    %905 = vst [vmem:[#allocation10 + $0x50] sm:$0xff] %v889
    %906 = vst [vmem:[#allocation10 + $0x58] sm:$0xff] %v890
    %907 = vst [vmem:[#allocation10 + $0x60] sm:$0xff] %v891
    %908 = vst [vmem:[#allocation10 + $0x68] sm:$0xff] %v892
    %909 = vst [vmem:[#allocation10 + $0x70] sm:$0xff] %v893
    %910 = vst [vmem:[#allocation10 + $0x78] sm:$0xff] %v894
    // Predicated region
    $region42: #{tpu_custom_call.1} parent=1 // pred_check
      _
    $region43: #{tpu_custom_call.1} parent=1 // pred_check_branch
      %912 = sbr.rel (0) target = $region45
    $region44: #{tpu_custom_call.1} parent=1 // pred_region
      %s914 = ssub.s32 2048, 2048
      %915 = vsyncadd [#allocation4], %s914
      %s916 = sshll.u32 [#allocation10], 4
      %s917 = int_to_ptr.vmem [resolvable:$true] %s916
      %922 = dma.vmem_to_hbm [thread:$0]  %s917, 2048, %s6, [#allocation4], 128, 128, 8
    $region45: #{tpu_custom_call.1} parent=1 // pred_fallthru
      _
    // Predicated region
    $region46: #{tpu_custom_call.1} parent=1 // pred_check
      _
    $region47: #{tpu_custom_call.1} parent=1 // pred_check_branch
      %924 = sbr.rel (0) target = $region49
    $region48: #{tpu_custom_call.1} parent=1 // pred_region
      %925 = dma.done [#allocation4], 2048
    $region49: #{tpu_custom_call.1} parent=1 // pred_fallthru
      _
    %926 = vsyncpa [#allocation3], 1
    %927 = vsyncpa [#allocation6], 1
    %928 = vsyncpa [#allocation9], 1
    %929 = vsyncpa [#allocation4], 1

</llo_original>
